<compile_context>
chip_gen: v5e
topology: v5e:2x2
jax: 0.10.0
libtpu: 0.0.40
codegen_flags: <defaults>
</compile_context>

<pallas_src>
import functools

import jax
import jax.numpy as jnp
from jax.experimental import pallas as pl
from jax.experimental.pallas import tpu as pltpu


_LANES = 128  # lane width; all weight blocks are zero-padded to 128 output lanes


def _pad16(n: int) -> int:
    # keep packed-weight sublane offsets aligned to the bf16 (16, 128) tile
    return ((n + 15) // 16) * 16


# ---------------------------------------------------------------------------
# Kernel 1: edge-free path.
#   h1  = tanh(x  @ W1 + c1)      W1 = Wfc @ Wroot1,  c1 = bfc @ Wroot1 + b1
#   h2  = tanh(h1 @ W2 + b2)      W2 = Wroot2
#   out = h2 @ Wheads + bheads    Wheads = [Wlog | Wval | 0]   (lane-dense 128)
# Packed weight blob rows: [0:Dp) W1p | [Dp:Dp+128) W2p | [Dp+128:Dp+256) Whp.
# ---------------------------------------------------------------------------
def _gcm_noedge_kernel(x_ref, w_ref, b_ref, out_ref):
    dp = x_ref.shape[1]                      # padded obs dim (static)
    b = b_ref[...]                           # (3, 128) f32 biases
    h1 = jnp.tanh(
        jnp.dot(x_ref[...], w_ref[0:dp, :], preferred_element_type=jnp.float32)
        + b[0:1, :])
    h2 = jnp.tanh(
        jnp.dot(h1.astype(jnp.bfloat16), w_ref[dp:dp + _LANES, :],
                preferred_element_type=jnp.float32)
        + b[1:2, :])
    out_ref[...] = (
        jnp.dot(h2.astype(jnp.bfloat16), w_ref[dp + _LANES:dp + 2 * _LANES, :],
                preferred_element_type=jnp.float32)
        + b[2:3, :])


# ---------------------------------------------------------------------------
# Kernel 2: general edge path (dense weighted adjacency A[i, j] = w(j -> i)).
# Each GraphConv is ONE K=256 matmul over z = concat([A @ h, h], lanes), with
# the rel/root weights stacked sublane-wise in the packed blob:
#   rows [0:Dp)            Wfc  (padded)
#   rows [Dp:Dp+256)       [Wrel1 ; 0 ; Wroot1 ; 0]
#   rows [Dp+256:Dp+512)   [Wrel2 ; 0 ; Wroot2 ; 0]
#   rows [Dp+512:Dp+640)   [Wlog | Wval | 0]
# ---------------------------------------------------------------------------
def _gcm_edges_kernel(x_ref, adj_ref, w_ref, b_ref, out_ref):
    dp = x_ref.shape[1]
    b = b_ref[...]                           # (4, 128) f32 biases
    adj = adj_ref[...]                       # (N, N) bf16

    # preprocessor Linear (cannot be folded once real edges exist)
    h0 = (jnp.dot(x_ref[...], w_ref[0:dp, :], preferred_element_type=jnp.float32)
          + b[0:1, :])
    h0b = h0.astype(jnp.bfloat16)

    # GraphConv 1 + Tanh : fused rel/root, K = 256 contraction
    agg1 = jnp.dot(adj, h0b, preferred_element_type=jnp.float32).astype(jnp.bfloat16)
    z1 = jnp.concatenate([agg1, h0b], axis=-1)          # (N, 256), lane-tile aligned
    h1 = jnp.tanh(
        jnp.dot(z1, w_ref[dp:dp + 2 * _LANES, :], preferred_element_type=jnp.float32)
        + b[1:2, :])
    h1b = h1.astype(jnp.bfloat16)

    # GraphConv 2 + Tanh
    agg2 = jnp.dot(adj, h1b, preferred_element_type=jnp.float32).astype(jnp.bfloat16)
    z2 = jnp.concatenate([agg2, h1b], axis=-1)
    h2 = jnp.tanh(
        jnp.dot(z2, w_ref[dp + 2 * _LANES:dp + 4 * _LANES, :],
                preferred_element_type=jnp.float32)
        + b[2:3, :])

    # fused logit + value heads, single lane-dense (N, 128) store
    out_ref[...] = (
        jnp.dot(h2.astype(jnp.bfloat16), w_ref[dp + 4 * _LANES:dp + 5 * _LANES, :],
                preferred_element_type=jnp.float32)
        + b[3:4, :])


# ---------------------------------------------------------------------------
# JAX wrappers: pack parameters, cast to bf16, call the gridless pallas_call.
# ---------------------------------------------------------------------------
@functools.partial(jax.jit, static_argnames=("num_outputs",))
def gcm_forward_noedge(obs, params, *, num_outputs):
    """Edge-free fused forward. obs: (N, obs_dim) f32 -> (logits, cur_val)."""
    N, D = obs.shape
    G = params["wroot2"].shape[0]
    O = num_outputs
    assert G <= _LANES and O + 1 <= _LANES
    Dp = _pad16(D)

    # fold the (linear) preprocessor into the edge-free first GraphConv
    w1 = params["wfc"] @ params["wroot1"]                          # (D, G)
    c1 = params["bfc"] @ params["wroot1"] + params["b1"]           # (1, G)

    w1p = jnp.zeros((Dp, _LANES), jnp.float32).at[:D, :G].set(w1)
    w2p = jnp.zeros((_LANES, _LANES), jnp.float32).at[:G, :G].set(params["wroot2"])
    whp = (jnp.zeros((_LANES, _LANES), jnp.float32)
           .at[:G, :O].set(params["wlog"])
           .at[:G, O:O + 1].set(params["wval"]))
    wblob = jnp.concatenate([w1p, w2p, whp], axis=0).astype(jnp.bfloat16)

    bblob = jnp.zeros((3, _LANES), jnp.float32)
    bblob = bblob.at[0, :G].set(c1[0])
    bblob = bblob.at[1, :G].set(params["b2"][0])
    bblob = bblob.at[2, :O].set(params["blog"][0]).at[2, O].set(params["bval"][0, 0])

    x = obs
    if Dp != D:
        x = jnp.pad(x, ((0, 0), (0, Dp - D)))
    x = x.astype(jnp.bfloat16)

    out = pl.pallas_call(
        _gcm_noedge_kernel,
        out_shape=jax.ShapeDtypeStruct((N, _LANES), jnp.float32),
        in_specs=[pl.BlockSpec(memory_space=pltpu.MemorySpace.VMEM)] * 3,
        out_specs=pl.BlockSpec(memory_space=pltpu.MemorySpace.VMEM),
    )(x, wblob, bblob)
    return out[:, :O], out[:, O]


@functools.partial(jax.jit, static_argnames=("num_outputs",))
def gcm_forward_edges(obs, adj, params, *, num_outputs):
    """General path with a dense weighted adjacency adj: (N, N) f32."""
    N, D = obs.shape
    G = params["wroot2"].shape[0]
    O = num_outputs
    assert G <= _LANES and O + 1 <= _LANES
    Dp = _pad16(D)

    wfcp = jnp.zeros((Dp, _LANES), jnp.float32).at[:D, :G].set(params["wfc"])
    wcat1 = (jnp.zeros((2 * _LANES, _LANES), jnp.float32)
             .at[:G, :G].set(params["wrel1"])
             .at[_LANES:_LANES + G, :G].set(params["wroot1"]))
    wcat2 = (jnp.zeros((2 * _LANES, _LANES), jnp.float32)
             .at[:G, :G].set(params["wrel2"])
             .at[_LANES:_LANES + G, :G].set(params["wroot2"]))
    whp = (jnp.zeros((_LANES, _LANES), jnp.float32)
           .at[:G, :O].set(params["wlog"])
           .at[:G, O:O + 1].set(params["wval"]))
    wblob = jnp.concatenate([wfcp, wcat1, wcat2, whp], axis=0).astype(jnp.bfloat16)

    bblob = jnp.zeros((4, _LANES), jnp.float32)
    bblob = bblob.at[0, :G].set(params["bfc"][0])
    bblob = bblob.at[1, :G].set(params["b1"][0])
    bblob = bblob.at[2, :G].set(params["b2"][0])
    bblob = bblob.at[3, :O].set(params["blog"][0]).at[3, O].set(params["bval"][0, 0])

    x = obs
    if Dp != D:
        x = jnp.pad(x, ((0, 0), (0, Dp - D)))
    x = x.astype(jnp.bfloat16)
    adj = adj.astype(jnp.bfloat16)

    # TODO(synk): for large graphs the dense (N, N) adjacency must be tiled
    # (node-row "parallel" grid axis + source-node reduction axis) to fit the
    # 64 MiB VMEM of v7x; at the RL rollout sizes used here it is tiny.
    out = pl.pallas_call(
        _gcm_edges_kernel,
        out_shape=jax.ShapeDtypeStruct((N, _LANES), jnp.float32),
        in_specs=[pl.BlockSpec(memory_space=pltpu.MemorySpace.VMEM)] * 4,
        out_specs=pl.BlockSpec(memory_space=pltpu.MemorySpace.VMEM),
    )(x, adj, wblob, bblob)
    return out[:, :O], out[:, O]


# ---------------------------------------------------------------------------
# Plain-JAX glue: state handling + forward wrapper (mirrors module.forward)
# ---------------------------------------------------------------------------
def ray_sparse_obs_graph_forward(obs_flat, seq_lens, state, params, num_outputs):
    """Mirrors RaySparseObsGraph.forward (edge_selectors=None, use_prev_action=False).

    obs_flat: (B*T, obs_dim) f32
    state: [nodes (Nold, obs_dim), edges (2, E) int32, weights (1, E) f32]
    returns (logits (B*T, num_outputs), new_state), cur_val (B*T,)
    """
    del seq_lens  # per-node GNN with the given edge set; no per-batch reshape needed
    nodes, edges, weights = state
    N = obs_flat.shape[0]

    # TODO(synk): SparseGCM edge_selectors (e.g. BernoulliEdge) are not translated;
    # with edge_selectors=None no edges are ever created, so the edge-free fast
    # path is the one this module config actually exercises.
    # TODO(synk): previously stored graph nodes are not re-ingested into the GNN;
    # with edge_selectors=None they can never influence the new nodes' outputs.
    if edges.shape[1] > 0:  # static Python check on the concrete state shapes
        # Dense weighted adjacency over the current nodes: A[i, j] = weight(j -> i).
        # Edges are honored exactly as given (no per-batch masking is applied).
        adj = jnp.zeros((N, N), jnp.float32).at[edges[1], edges[0]].add(weights[0])
        logits, cur_val = gcm_forward_edges(obs_flat, adj, params, num_outputs=num_outputs)
    else:
        logits, cur_val = gcm_forward_noedge(obs_flat, params, num_outputs=num_outputs)

    # State update: new observations appended as graph nodes; edges/weights unchanged.
    if nodes.shape[0] == 0:
        new_nodes = obs_flat
    else:
        new_nodes = jnp.concatenate([nodes, obs_flat], axis=0)
    return (logits, [new_nodes, edges, weights]), cur_val


# ---------------------------------------------------------------------------
# Deterministic parameter init (shapes from the module's __init__ / config)
# ---------------------------------------------------------------------------
def init_params(key, obs_dim, gnn_size, num_outputs):
    ks = jax.random.split(key, 8)

    def linear_w(k, fan_in, fan_out):
        return (jax.random.normal(k, (fan_in, fan_out), jnp.float32)
                / jnp.sqrt(jnp.float32(fan_in)))

    def normc_w(k, fan_in, fan_out, std):
        w = jax.random.normal(k, (fan_in, fan_out), jnp.float32)
        return std * w / jnp.sqrt(jnp.sum(w * w, axis=0, keepdims=True))

    G = gnn_size
    return {
        # preprocessor Linear(obs_dim, gnn_input_size)
        "wfc": linear_w(ks[0], obs_dim, G),
        "bfc": jnp.zeros((1, G), jnp.float32),
        # GraphConv(64, 64) #1: lin_rel (with bias), lin_root (no bias)
        "wrel1": linear_w(ks[1], G, G),
        "wroot1": linear_w(ks[2], G, G),
        "b1": jnp.zeros((1, G), jnp.float32),
        # GraphConv(64, 64) #2
        "wrel2": linear_w(ks[3], G, G),
        "wroot2": linear_w(ks[4], G, G),
        "b2": jnp.zeros((1, G), jnp.float32),
        # logit / value branches (normc_initializer(0.01))
        "wlog": normc_w(ks[5], G, num_outputs, 0.01),
        "blog": jnp.zeros((1, num_outputs), jnp.float32),
        "wval": normc_w(ks[6], G, 1, 0.01),
        "bval": jnp.zeros((1, 1), jnp.float32),
    }


def _reference_forward(x, adj, p):
    """Pure f32 JAX reference of the module math (dense adjacency)."""
    h0 = x @ p["wfc"] + p["bfc"]
    h1 = jnp.tanh(adj @ h0 @ p["wrel1"] + h0 @ p["wroot1"] + p["b1"])
    h2 = jnp.tanh(adj @ h1 @ p["wrel2"] + h1 @ p["wroot2"] + p["b2"])
    return h2 @ p["wlog"] + p["blog"], h2 @ p["wval"] + p["bval"]


if __name__ == "__main__":
    key = jax.random.PRNGKey(0)
    k_param, k_obs = jax.random.split(key)

    # Shapes consistent with the module: B=2 sequences of T=8 steps,
    # obs_dim=32, gnn_input_size=gnn_output_size=64, num_outputs=8.
    B, T, OBS_DIM, GNN, NUM_OUT = 2, 8, 32, 64, 8
    N = B * T

    params = init_params(k_param, OBS_DIM, GNN, NUM_OUT)
    obs_flat = jax.random.normal(k_obs, (N, OBS_DIM), jnp.float32)
    seq_lens = jnp.full((B,), T, jnp.int32)

    # --- path 1: get_initial_state() -> empty nodes / edges / weights -------
    init_state = [
        jnp.zeros((0, OBS_DIM), jnp.float32),
        jnp.zeros((2, 0), jnp.int32),
        jnp.zeros((1, 0), jnp.float32),
    ]
    (logits, new_state), cur_val = ray_sparse_obs_graph_forward(
        obs_flat, seq_lens, init_state, params, NUM_OUT)
    logits = jax.block_until_ready(logits)
    cur_val = jax.block_until_ready(cur_val)

    ref_logits, ref_values = _reference_forward(
        obs_flat, jnp.zeros((N, N), jnp.float32), params)
    assert logits.shape == (N, NUM_OUT)
    assert cur_val.shape == (N,)
    assert new_state[0].shape == (N, OBS_DIM)
    # bf16 matmul inputs w/ f32 accumulation -> loose tolerance vs f32 reference
    assert jnp.allclose(logits, ref_logits, rtol=5e-2, atol=2e-3)
    assert jnp.allclose(cur_val, ref_values[:, 0], rtol=5e-2, atol=2e-3)

    # --- path 2: general edge path (synthetic temporal-chain edges) ---------
    src, dst = [], []
    for b_i in range(B):
        for t in range(1, T):
            src.append(b_i * T + t - 1)
            dst.append(b_i * T + t)
    edges = jnp.array([src, dst], jnp.int32)
    weights = jnp.ones((1, edges.shape[1]), jnp.float32)
    state_e = [jnp.zeros((0, OBS_DIM), jnp.float32), edges, weights]

    (logits_e, _), cur_val_e = ray_sparse_obs_graph_forward(
        obs_flat, seq_lens, state_e, params, NUM_OUT)
    logits_e = jax.block_until_ready(logits_e)
    cur_val_e = jax.block_until_ready(cur_val_e)

    adj_ref = jnp.zeros((N, N), jnp.float32).at[edges[1], edges[0]].add(weights[0])
    ref_logits_e, ref_values_e = _reference_forward(obs_flat, adj_ref, params)
    assert jnp.allclose(logits_e, ref_logits_e, rtol=5e-2, atol=2e-3)
    assert jnp.allclose(cur_val_e, ref_values_e[:, 0], rtol=5e-2, atol=2e-3)

    print("KERNEL_OK")
</pallas_src>

<mosaic_0001>
module attributes {stable_mosaic.version = 11 : i64} {
  func.func @_gcm_noedge_kernel(%arg0: memref<16x32xbf16, #tpu.memory_space<vmem>>, %arg1: memref<288x128xbf16, #tpu.memory_space<vmem>>, %arg2: memref<3x128xf32, #tpu.memory_space<vmem>>, %arg3: memref<16x128xf32, #tpu.memory_space<vmem>>) attributes {dimension_semantics = [], scalar_prefetch = 0 : i64, scratch_operands = 0 : i64, tpu.core_type = #tpu.core_type<tc>} {
    %c0 = arith.constant 0 : index
    %c0_0 = arith.constant 0 : index
    %0 = vector.load %arg2[%c0, %c0_0] : memref<3x128xf32, #tpu.memory_space<vmem>>, vector<3x128xf32>
    %c0_1 = arith.constant 0 : index
    %c0_2 = arith.constant 0 : index
    %1 = vector.load %arg0[%c0_1, %c0_2] : memref<16x32xbf16, #tpu.memory_space<vmem>>, vector<16x32xbf16>
    %c0_3 = arith.constant 0 : index
    %c0_4 = arith.constant 0 : index
    %2 = vector.load %arg1[%c0_3, %c0_4] : memref<288x128xbf16, #tpu.memory_space<vmem>>, vector<32x128xbf16>
    %cst = arith.constant dense<0.000000e+00> : vector<16x128xf32>
    %3 = tpu.matmul %1, %2, %cst {dimension_numbers = #tpu.dot_dimension_numbers<[1], [0], [0], [1], [0, 0, 1, 1], [], []>} : vector<16x32xbf16>, vector<32x128xbf16>, vector<16x128xf32> -> vector<16x128xf32>
    %4 = vector.extract_strided_slice %0 {offsets = [0, 0], sizes = [1, 128], strides = [1, 1]} : vector<3x128xf32> to vector<1x128xf32>
    %5 = vector.broadcast %4 : vector<1x128xf32> to vector<16x128xf32>
    %6 = arith.addf %3, %5 : vector<16x128xf32>
    %7 = math.tanh %6 : vector<16x128xf32>
    %8 = arith.truncf %7 : vector<16x128xf32> to vector<16x128xbf16>
    %c32 = arith.constant 32 : index
    %c0_5 = arith.constant 0 : index
    %9 = vector.load %arg1[%c32, %c0_5] : memref<288x128xbf16, #tpu.memory_space<vmem>>, vector<128x128xbf16>
    %cst_6 = arith.constant dense<0.000000e+00> : vector<16x128xf32>
    %10 = tpu.matmul %8, %9, %cst_6 {dimension_numbers = #tpu.dot_dimension_numbers<[1], [0], [0], [1], [0, 0, 1, 1], [], []>} : vector<16x128xbf16>, vector<128x128xbf16>, vector<16x128xf32> -> vector<16x128xf32>
    %11 = vector.extract_strided_slice %0 {offsets = [1, 0], sizes = [1, 128], strides = [1, 1]} : vector<3x128xf32> to vector<1x128xf32>
    %12 = vector.broadcast %11 : vector<1x128xf32> to vector<16x128xf32>
    %13 = arith.addf %10, %12 : vector<16x128xf32>
    %14 = math.tanh %13 : vector<16x128xf32>
    %15 = arith.truncf %14 : vector<16x128xf32> to vector<16x128xbf16>
    %c160 = arith.constant 160 : index
    %c0_7 = arith.constant 0 : index
    %16 = vector.load %arg1[%c160, %c0_7] : memref<288x128xbf16, #tpu.memory_space<vmem>>, vector<128x128xbf16>
    %cst_8 = arith.constant dense<0.000000e+00> : vector<16x128xf32>
    %17 = tpu.matmul %15, %16, %cst_8 {dimension_numbers = #tpu.dot_dimension_numbers<[1], [0], [0], [1], [0, 0, 1, 1], [], []>} : vector<16x128xbf16>, vector<128x128xbf16>, vector<16x128xf32> -> vector<16x128xf32>
    %18 = vector.extract_strided_slice %0 {offsets = [2, 0], sizes = [1, 128], strides = [1, 1]} : vector<3x128xf32> to vector<1x128xf32>
    %19 = vector.broadcast %18 : vector<1x128xf32> to vector<16x128xf32>
    %20 = arith.addf %17, %19 : vector<16x128xf32>
    %c0_9 = arith.constant 0 : index
    %c0_10 = arith.constant 0 : index
    %21 = vector.load %arg3[%c0_9, %c0_10] : memref<16x128xf32, #tpu.memory_space<vmem>>, vector<16x128xf32>
    tpu.vector_store %arg3[%c0_9, %c0_10], %20 {strides = array<i32>} : memref<16x128xf32, #tpu.memory_space<vmem>>, vector<16x128xf32>,
    return
  }
}

</mosaic_0001>

<llo_original>
// kernel: gcm_forward_noedge.1
$region0: #{gcm_forward_noedge.1}
  #allocation0 [shape = 'u32[]', space=smem, size = 0x4, offset = 0x4, fixed_abs, tag = 'smem constant byte address 0x4 - core index']
  #allocation1 [shape = 'u32[72,128]{1,0:T(1,128)}', space=vmem, size = 0x9000, scoped, tag = 'internal scratch']
  %s0 = inlined_call_operand.vmem [shape: bf16[16,32], index: 0, kind: input, shape index: {}]
  %s1 = inlined_call_operand.vmem [shape: bf16[288,128], index: 1, kind: input, shape index: {}]
  %s2 = inlined_call_operand.vmem [shape: f32[3,128], index: 2, kind: input, shape index: {}]
  %s3 = inlined_call_operand.vmem [shape: f32[16,128], index: 3, kind: output, shape index: {}]
  %s4 = sld [smem:[#allocation0]]
  $region22: #{gcm_forward_noedge.1} parent=0
    _
  %s6 = ssub.s32 1, %s4
  %s7 = scalar_select 0, %s6, %s4
  // Predicated region
  $region2: #{gcm_forward_noedge.1} parent=0 // pred_check
    _
  $region3: #{gcm_forward_noedge.1} parent=0 // pred_check_branch
    %9 = sbr.rel (0) target = $region5
  $region4: #{gcm_forward_noedge.1} parent=0 // pred_region
    _
  $region5: #{gcm_forward_noedge.1} parent=0 // pred_fallthru
    _
  // Predicated region
  $region6: #{gcm_forward_noedge.1} parent=0 // pred_check
    _
  $region7: #{gcm_forward_noedge.1} parent=0 // pred_check_branch
    %11 = sbr.rel (0) target = $region9
  $region8: #{gcm_forward_noedge.1} parent=0 // pred_region
    _
  $region9: #{gcm_forward_noedge.1} parent=0 // pred_fallthru
    _
  // Predicated region
  $region10: #{gcm_forward_noedge.1} parent=0 // pred_check
    _
  $region11: #{gcm_forward_noedge.1} parent=0 // pred_check_branch
    %13 = sbr.rel (0) target = $region13
  $region12: #{gcm_forward_noedge.1} parent=0 // pred_region
    _
  $region13: #{gcm_forward_noedge.1} parent=0 // pred_fallthru
    _
  %v15 = vld [vmem:[%s2] sm:$0x7]
  %v16 = vld [vmem:[%s0] sm:$0xf]
  %v17 = vld [vmem:[%s0 + $0x4] sm:$0xf]
  %v18 = vld [vmem:[%s1] sm:$0xf]
  %v19 = vld [vmem:[%s1 + $0x4] sm:$0xf]
  %v20 = vld [vmem:[%s1 + $0x8] sm:$0xf]
  %v21 = vld [vmem:[%s1 + $0xc] sm:$0xf]
  %v22 = vperm.slane %v15, 0
  %v25 = vunpack.c.l.b16 %v16
  %v26 = vunpack.c.l.b16 %v17
  %v27 = vpack.c.b16 %v26, %v25
  %v32 = vunpack.c.l.b16 %v18
  %v33 = vunpack.c.l.b16 %v19
  %v34 = vunpack.c.l.b16 %v20
  %v35 = vunpack.c.l.b16 %v21
  %v36 = vpack.c.b16 %v33, %v32
  %v37 = vpack.c.b16 %v35, %v34
  %vm40 = vcmask 261120
  %v42 = vsel %vm40, %v27, 0
  %44 = vmatpush.bf16.msra.mxu0 0
  %45 = vmatpush.bf16.msra.mxu0 0
  %46 = vmatpush.bf16.msra.mxu0 0
  %47 = vmatpush.bf16.msra.mxu0 0
  %48 = vmatpush.bf16.msra.mxu0 0
  %49 = vmatpush.bf16.msra.mxu0 0
  %50 = vmatpush.bf16.msra.mxu0 %v37
  %51 = vmatpush.bf16.msra.mxu0 %v36
  %52 = vmatmul.bf16.gmra.mxu0 %v42
  %v53 = vpop.f32.mrf.mxu0
  %v54 = vadd.f32 %v22, %v53
  %v55 = vpop.f32.mrf.mxu0
  %v56 = vadd.f32 %v22, %v55
  %57 = vdwg.mxu0
  %v58 = vtanh.pop %v54
  %v59 = vtanh.pop %v56
  %v60 = vpack.c.bf16 %v59, %v58
  %v61 = vld [vmem:[%s1 + $0x10] sm:$0xf]
  %v62 = vld [vmem:[%s1 + $0x14] sm:$0xf]
  %v63 = vld [vmem:[%s1 + $0x18] sm:$0xf]
  %v64 = vld [vmem:[%s1 + $0x1c] sm:$0xf]
  %v65 = vld [vmem:[%s1 + $0x20] sm:$0xf]
  %v66 = vld [vmem:[%s1 + $0x24] sm:$0xf]
  %v67 = vld [vmem:[%s1 + $0x28] sm:$0xf]
  %v68 = vld [vmem:[%s1 + $0x2c] sm:$0xf]
  %v69 = vld [vmem:[%s1 + $0x30] sm:$0xf]
  %v70 = vld [vmem:[%s1 + $0x34] sm:$0xf]
  %v71 = vld [vmem:[%s1 + $0x38] sm:$0xf]
  %v72 = vld [vmem:[%s1 + $0x3c] sm:$0xf]
  %v73 = vld [vmem:[%s1 + $0x40] sm:$0xf]
  %v74 = vld [vmem:[%s1 + $0x44] sm:$0xf]
  %v75 = vld [vmem:[%s1 + $0x48] sm:$0xf]
  %v76 = vld [vmem:[%s1 + $0x4c] sm:$0xf]
  %v77 = vperm.slane %v15, 1
  %v94 = vunpack.c.l.b16 %v61
  %v95 = vunpack.c.l.b16 %v62
  %v96 = vunpack.c.l.b16 %v63
  %v97 = vunpack.c.l.b16 %v64
  %v98 = vunpack.c.l.b16 %v65
  %v99 = vunpack.c.l.b16 %v66
  %v100 = vunpack.c.l.b16 %v67
  %v101 = vunpack.c.l.b16 %v68
  %v102 = vunpack.c.l.b16 %v69
  %v103 = vunpack.c.l.b16 %v70
  %v104 = vunpack.c.l.b16 %v71
  %v105 = vunpack.c.l.b16 %v72
  %v106 = vunpack.c.l.b16 %v73
  %v107 = vunpack.c.l.b16 %v74
  %v108 = vunpack.c.l.b16 %v75
  %v109 = vunpack.c.l.b16 %v76
  %v110 = vpack.c.b16 %v95, %v94
  %v111 = vpack.c.b16 %v97, %v96
  %v112 = vpack.c.b16 %v99, %v98
  %v113 = vpack.c.b16 %v101, %v100
  %v114 = vpack.c.b16 %v103, %v102
  %v115 = vpack.c.b16 %v105, %v104
  %v116 = vpack.c.b16 %v107, %v106
  %v117 = vpack.c.b16 %v109, %v108
  %126 = vmatpush.bf16.msra.mxu0 %v117
  %127 = vmatpush.bf16.msra.mxu0 %v116
  %128 = vmatpush.bf16.msra.mxu0 %v115
  %129 = vmatpush.bf16.msra.mxu0 %v114
  %130 = vmatpush.bf16.msra.mxu0 %v113
  %131 = vmatpush.bf16.msra.mxu0 %v112
  %132 = vmatpush.bf16.msra.mxu0 %v111
  %133 = vmatpush.bf16.msra.mxu0 %v110
  %134 = vmatmul.bf16.gmra.mxu0 %v60
  %v135 = vpop.f32.mrf.mxu0
  %v136 = vadd.f32 %v77, %v135
  %v137 = vpop.f32.mrf.mxu0
  %v138 = vadd.f32 %v77, %v137
  %139 = vdwg.mxu0
  %v140 = vtanh.pop %v136
  %v141 = vtanh.pop %v138
  %v142 = vpack.c.bf16 %v141, %v140
  %v143 = vld [vmem:[%s1 + $0x50] sm:$0xf]
  %v144 = vld [vmem:[%s1 + $0x54] sm:$0xf]
  %v145 = vld [vmem:[%s1 + $0x58] sm:$0xf]
  %v146 = vld [vmem:[%s1 + $0x5c] sm:$0xf]
  %v147 = vld [vmem:[%s1 + $0x60] sm:$0xf]
  %v148 = vld [vmem:[%s1 + $0x64] sm:$0xf]
  %v149 = vld [vmem:[%s1 + $0x68] sm:$0xf]
  %v150 = vld [vmem:[%s1 + $0x6c] sm:$0xf]
  %v151 = vld [vmem:[%s1 + $0x70] sm:$0xf]
  %v152 = vld [vmem:[%s1 + $0x74] sm:$0xf]
  %v153 = vld [vmem:[%s1 + $0x78] sm:$0xf]
  %v154 = vld [vmem:[%s1 + $0x7c] sm:$0xf]
  %v155 = vld [vmem:[%s1 + $0x80] sm:$0xf]
  %v156 = vld [vmem:[%s1 + $0x84] sm:$0xf]
  %v157 = vld [vmem:[%s1 + $0x88] sm:$0xf]
  %v158 = vld [vmem:[%s1 + $0x8c] sm:$0xf]
  %v159 = vperm.slane %v15, 2
  %v176 = vunpack.c.l.b16 %v143
  %v177 = vunpack.c.l.b16 %v144
  %v178 = vunpack.c.l.b16 %v145
  %v179 = vunpack.c.l.b16 %v146
  %v180 = vunpack.c.l.b16 %v147
  %v181 = vunpack.c.l.b16 %v148
  %v182 = vunpack.c.l.b16 %v149
  %v183 = vunpack.c.l.b16 %v150
  %v184 = vunpack.c.l.b16 %v151
  %v185 = vunpack.c.l.b16 %v152
  %v186 = vunpack.c.l.b16 %v153
  %v187 = vunpack.c.l.b16 %v154
  %v188 = vunpack.c.l.b16 %v155
  %v189 = vunpack.c.l.b16 %v156
  %v190 = vunpack.c.l.b16 %v157
  %v191 = vunpack.c.l.b16 %v158
  %v192 = vpack.c.b16 %v177, %v176
  %v193 = vpack.c.b16 %v179, %v178
  %v194 = vpack.c.b16 %v181, %v180
  %v195 = vpack.c.b16 %v183, %v182
  %v196 = vpack.c.b16 %v185, %v184
  %v197 = vpack.c.b16 %v187, %v186
  %v198 = vpack.c.b16 %v189, %v188
  %v199 = vpack.c.b16 %v191, %v190
  %208 = vmatpush.bf16.msra.mxu0 %v199
  %209 = vmatpush.bf16.msra.mxu0 %v198
  %210 = vmatpush.bf16.msra.mxu0 %v197
  %211 = vmatpush.bf16.msra.mxu0 %v196
  %212 = vmatpush.bf16.msra.mxu0 %v195
  %213 = vmatpush.bf16.msra.mxu0 %v194
  %214 = vmatpush.bf16.msra.mxu0 %v193
  %215 = vmatpush.bf16.msra.mxu0 %v192
  %216 = vmatmul.bf16.gmra.mxu0 %v142
  %v217 = vpop.f32.mrf.mxu0
  %v218 = vadd.f32 %v159, %v217
  %v219 = vpop.f32.mrf.mxu0
  %v220 = vadd.f32 %v159, %v219
  %221 = vdwg.mxu0
  %222 = vst [vmem:[%s3] sm:$0xff] %v218
  %223 = vst [vmem:[%s3 + $0x8] sm:$0xff] %v220
  // Predicated region
  $region14: #{gcm_forward_noedge.1} parent=0 // pred_check
    _
  $region15: #{gcm_forward_noedge.1} parent=0 // pred_check_branch
    %225 = sbr.rel (0) target = $region17
  $region16: #{gcm_forward_noedge.1} parent=0 // pred_region
    _
  $region17: #{gcm_forward_noedge.1} parent=0 // pred_fallthru
    _
  // Predicated region
  $region18: #{gcm_forward_noedge.1} parent=0 // pred_check
    _
  $region19: #{gcm_forward_noedge.1} parent=0 // pred_check_branch
    %227 = sbr.rel (0) target = $region21
  $region20: #{gcm_forward_noedge.1} parent=0 // pred_region
    _
  $region21: #{gcm_forward_noedge.1} parent=0 // pred_fallthru
    _

</llo_original>
